<compile_context>
chip_gen: v5e
topology: v5e:2x2
jax: 0.10.0
libtpu: 0.0.40
codegen_flags: <defaults>
</compile_context>

<pallas_src>
import functools

import jax
import jax.numpy as jnp
from jax.experimental import pallas as pl
from jax.experimental.pallas import tpu as pltpu

HIDDEN = 30          # logical hidden width (PyTorch: nn.Linear(s_dim, 30))
HIDDEN_PAD = 128     # lane-dense padded hidden width
OUT_PAD = 128        # lane-dense padded action width


def _round_up(n, m):
    return ((n + m - 1) // m) * m


def anet_kernel(x_ref, w1_ref, b1_ref, w2_ref, b2_ref, o_ref):
    # x: (TB, S), w1: (S, Hp), b1: (1, Hp), w2: (Hp, Ap), b2: (1, Ap), o: (TB, Ap)
    x = x_ref[...]
    h = jnp.dot(x, w1_ref[...], preferred_element_type=jnp.float32) + b1_ref[...]
    h = jnp.maximum(h, 0.0)                                  # ReLU
    y = jnp.dot(h, w2_ref[...], preferred_element_type=jnp.float32) + b2_ref[...]
    o_ref[...] = (jnp.tanh(y) * 10.0).astype(o_ref.dtype)    # tanh then *10


@functools.partial(jax.jit, static_argnames=("a_dim", "tile_b"))
def anet_forward(x, w1, b1, w2, b2, *, a_dim, tile_b=512):
    """x: (B, S) f32. w1: (S, Hp), b1: (1, Hp), w2: (Hp, Ap), b2: (1, Ap) — padded."""
    B, S = x.shape
    Hp = w1.shape[1]
    Ap = w2.shape[1]

    # Batch tile: multiple of 8 (sublane), capped at tile_b for VMEM friendliness
    # (keeps the design independent of B — important on v7x's 64 MiB VMEM).
    TB = min(tile_b, _round_up(B, 8))
    Bp = _round_up(B, TB)
    if Bp != B:
        x = jnp.pad(x, ((0, Bp - B), (0, 0)))
    grid = (Bp // TB,)

    cost = pl.CostEstimate(
        flops=2 * Bp * (S * Hp + Hp * Ap),
        transcendentals=Bp * Ap,
        bytes_accessed=4 * (Bp * S + S * Hp + Hp + Hp * Ap + Ap + Bp * Ap),
    )

    out_padded = pl.pallas_call(
        anet_kernel,
        out_shape=jax.ShapeDtypeStruct((Bp, Ap), jnp.float32),
        grid=grid,
        in_specs=[
            pl.BlockSpec((TB, S), lambda i: (i, 0)),   # x tile (pipelined)
            pl.BlockSpec((S, Hp), lambda i: (0, 0)),   # w1 resident
            pl.BlockSpec((1, Hp), lambda i: (0, 0)),   # b1 resident
            pl.BlockSpec((Hp, Ap), lambda i: (0, 0)),  # w2 resident
            pl.BlockSpec((1, Ap), lambda i: (0, 0)),   # b2 resident
        ],
        out_specs=pl.BlockSpec((TB, Ap), lambda i: (i, 0)),
        compiler_params=pltpu.CompilerParams(
            dimension_semantics=("parallel",),
        ),
        cost_estimate=cost,
    )(x, w1, b1, w2, b2)

    return out_padded[:B, :a_dim]


def init_params(key, s_dim, a_dim, hidden=HIDDEN):
    """Logical (unpadded) params mirroring the PyTorch init:
    weights ~ N(0, 0.1); biases keep nn.Linear default U(±1/sqrt(fan_in))."""
    k1, k2, k3, k4 = jax.random.split(key, 4)
    w1 = 0.1 * jax.random.normal(k1, (s_dim, hidden), dtype=jnp.float32)
    b1 = jax.random.uniform(
        k2, (1, hidden), dtype=jnp.float32,
        minval=-1.0 / jnp.sqrt(s_dim), maxval=1.0 / jnp.sqrt(s_dim))
    w2 = 0.1 * jax.random.normal(k3, (hidden, a_dim), dtype=jnp.float32)
    b2 = jax.random.uniform(
        k4, (1, a_dim), dtype=jnp.float32,
        minval=-1.0 / jnp.sqrt(hidden), maxval=1.0 / jnp.sqrt(hidden))
    return w1, b1, w2, b2


def pad_params(w1, b1, w2, b2, hidden_pad=HIDDEN_PAD, out_pad=OUT_PAD):
    """Zero-pad hidden dim -> hidden_pad and action dim -> out_pad for
    lane-dense layout. Padding is exactly zero so results are unchanged."""
    s_dim, hidden = w1.shape
    a_dim = w2.shape[1]
    w1p = jnp.pad(w1, ((0, 0), (0, hidden_pad - hidden)))
    b1p = jnp.pad(b1, ((0, 0), (0, hidden_pad - hidden)))
    w2p = jnp.pad(w2, ((0, hidden_pad - hidden), (0, out_pad - a_dim)))
    b2p = jnp.pad(b2, ((0, 0), (0, out_pad - a_dim)))
    return w1p, b1p, w2p, b2p


def anet_reference(x, w1, b1, w2, b2):
    h = jnp.maximum(x @ w1 + b1, 0.0)
    return jnp.tanh(h @ w2 + b2) * 10.0


if __name__ == "__main__":
    key = jax.random.PRNGKey(0)
    s_dim, a_dim, batch = 16, 4, 8

    kx, kp = jax.random.split(key)
    x = jax.random.normal(kx, (batch, s_dim), dtype=jnp.float32)

    # Logical params (match PyTorch init) and zero-padded kernel params.
    w1, b1, w2, b2 = init_params(kp, s_dim, a_dim)
    w1p, b1p, w2p, b2p = pad_params(w1, b1, w2, b2)

    out = anet_forward(x, w1p, b1p, w2p, b2p, a_dim=a_dim)
    out = jax.block_until_ready(out)

    ref = anet_reference(x, w1, b1, w2, b2)
    assert out.shape == (batch, a_dim)
    assert jnp.allclose(out, ref, atol=1e-5, rtol=1e-5)

    print("KERNEL_OK")
</pallas_src>

<mosaic_0001>
module attributes {stable_mosaic.version = 11 : i64} {
  func.func @anet_kernel(%arg0: i32, %arg1: memref<8x16xf32, #tpu.memory_space<vmem>>, %arg2: memref<16x128xf32, #tpu.memory_space<vmem>>, %arg3: memref<1x128xf32, #tpu.memory_space<vmem>>, %arg4: memref<128x128xf32, #tpu.memory_space<vmem>>, %arg5: memref<1x128xf32, #tpu.memory_space<vmem>>, %arg6: memref<8x128xf32, #tpu.memory_space<vmem>>) attributes {dimension_semantics = [#tpu.dimension_semantics<parallel>], iteration_bounds = array<i64: 1>, scalar_prefetch = 0 : i64, scratch_operands = 0 : i64, tpu.core_type = #tpu.core_type<tc>, window_params = [{transform_indices = @transform_0, window_bounds = array<i64: 8, 16>}, {pipeline_mode = #tpu.pipeline_mode<synchronous>, transform_indices = @transform_1, window_bounds = array<i64: 16, 128>}, {pipeline_mode = #tpu.pipeline_mode<synchronous>, transform_indices = @transform_2, window_bounds = array<i64: 1, 128>}, {pipeline_mode = #tpu.pipeline_mode<synchronous>, transform_indices = @transform_3, window_bounds = array<i64: 128, 128>}, {pipeline_mode = #tpu.pipeline_mode<synchronous>, transform_indices = @transform_4, window_bounds = array<i64: 1, 128>}, {transform_indices = @transform_5, window_bounds = array<i64: 8, 128>}]} {
    %c0 = arith.constant 0 : index
    %c0_0 = arith.constant 0 : index
    %0 = vector.load %arg1[%c0, %c0_0] : memref<8x16xf32, #tpu.memory_space<vmem>>, vector<8x16xf32>
    %c0_1 = arith.constant 0 : index
    %c0_2 = arith.constant 0 : index
    %1 = vector.load %arg2[%c0_1, %c0_2] : memref<16x128xf32, #tpu.memory_space<vmem>>, vector<16x128xf32>
    %cst = arith.constant dense<0.000000e+00> : vector<8x128xf32>
    %2 = tpu.matmul %0, %1, %cst {dimension_numbers = #tpu.dot_dimension_numbers<[1], [0], [0], [1], [0, 0, 1, 1], [], []>} : vector<8x16xf32>, vector<16x128xf32>, vector<8x128xf32> -> vector<8x128xf32>
    %c0_3 = arith.constant 0 : index
    %c0_4 = arith.constant 0 : index
    %3 = vector.load %arg3[%c0_3, %c0_4] : memref<1x128xf32, #tpu.memory_space<vmem>>, vector<1x128xf32>
    %4 = vector.broadcast %3 : vector<1x128xf32> to vector<8x128xf32>
    %5 = arith.addf %2, %4 : vector<8x128xf32>
    %cst_5 = arith.constant 0.000000e+00 : f32
    %6 = vector.broadcast %cst_5 : f32 to vector<8x128xf32>
    %7 = arith.maximumf %5, %6 : vector<8x128xf32>
    %c0_6 = arith.constant 0 : index
    %c0_7 = arith.constant 0 : index
    %8 = vector.load %arg4[%c0_6, %c0_7] : memref<128x128xf32, #tpu.memory_space<vmem>>, vector<128x128xf32>
    %cst_8 = arith.constant dense<0.000000e+00> : vector<8x128xf32>
    %9 = tpu.matmul %7, %8, %cst_8 {dimension_numbers = #tpu.dot_dimension_numbers<[1], [0], [0], [1], [0, 0, 1, 1], [], []>} : vector<8x128xf32>, vector<128x128xf32>, vector<8x128xf32> -> vector<8x128xf32>
    %c0_9 = arith.constant 0 : index
    %c0_10 = arith.constant 0 : index
    %10 = vector.load %arg5[%c0_9, %c0_10] : memref<1x128xf32, #tpu.memory_space<vmem>>, vector<1x128xf32>
    %11 = vector.broadcast %10 : vector<1x128xf32> to vector<8x128xf32>
    %12 = arith.addf %9, %11 : vector<8x128xf32>
    %13 = math.tanh %12 : vector<8x128xf32>
    %cst_11 = arith.constant 1.000000e+01 : f32
    %14 = vector.broadcast %cst_11 : f32 to vector<8x128xf32>
    %15 = arith.mulf %13, %14 : vector<8x128xf32>
    %c0_12 = arith.constant 0 : index
    %c0_13 = arith.constant 0 : index
    %16 = vector.load %arg6[%c0_12, %c0_13] : memref<8x128xf32, #tpu.memory_space<vmem>>, vector<8x128xf32>
    tpu.vector_store %arg6[%c0_12, %c0_13], %15 {strides = array<i32>} : memref<8x128xf32, #tpu.memory_space<vmem>>, vector<8x128xf32>,
    return
  }
  func.func @transform_0(%arg0: i32) -> (i32, i32) {
    %c0_i32 = arith.constant 0 : i32
    %c0_i32_0 = arith.constant 0 : i32
    return %arg0, %c0_i32 : i32, i32
  }
  func.func @transform_1(%arg0: i32) -> (i32, i32) {
    %c0_i32 = arith.constant 0 : i32
    %c0_i32_0 = arith.constant 0 : i32
    %c0_i32_1 = arith.constant 0 : i32
    return %c0_i32, %c0_i32_0 : i32, i32
  }
  func.func @transform_2(%arg0: i32) -> (i32, i32) {
    %c0_i32 = arith.constant 0 : i32
    %c0_i32_0 = arith.constant 0 : i32
    %c0_i32_1 = arith.constant 0 : i32
    return %c0_i32, %c0_i32_0 : i32, i32
  }
  func.func @transform_3(%arg0: i32) -> (i32, i32) {
    %c0_i32 = arith.constant 0 : i32
    %c0_i32_0 = arith.constant 0 : i32
    %c0_i32_1 = arith.constant 0 : i32
    return %c0_i32, %c0_i32_0 : i32, i32
  }
  func.func @transform_4(%arg0: i32) -> (i32, i32) {
    %c0_i32 = arith.constant 0 : i32
    %c0_i32_0 = arith.constant 0 : i32
    %c0_i32_1 = arith.constant 0 : i32
    return %c0_i32, %c0_i32_0 : i32, i32
  }
  func.func @transform_5(%arg0: i32) -> (i32, i32) {
    %c0_i32 = arith.constant 0 : i32
    %c0_i32_0 = arith.constant 0 : i32
    return %arg0, %c0_i32 : i32, i32
  }
}

</mosaic_0001>

<llo_original>
// kernel: anet_forward.1
$region0: #{anet_forward.1}
  #allocation0 [shape = 'u32[]', space=smem, size = 0x4, offset = 0x4, fixed_abs, tag = 'smem constant byte address 0x4 - core index']
  #allocation1 [shape = 'u32[72,128]{1,0:T(1,128)}', space=vmem, size = 0x9000, scoped, tag = 'internal scratch']
  %s0 = inlined_call_operand.hbm [shape: f32[8,16], index: 0, kind: input, shape index: {}]
  %s1 = inlined_call_operand.hbm [shape: f32[16,128], index: 1, kind: input, shape index: {}]
  %s2 = inlined_call_operand.vmem [shape: f32[1,128], index: 2, kind: input, shape index: {}]
  %s3 = inlined_call_operand.hbm [shape: f32[128,128], index: 3, kind: input, shape index: {}]
  %s4 = inlined_call_operand.vmem [shape: f32[1,128], index: 4, kind: input, shape index: {}]
  %s5 = inlined_call_operand.vmem [shape: f32[8,128], index: 5, kind: output, shape index: {}]
  %s6 = sld [smem:[#allocation0]]
  $region42: #{anet_forward.1} parent=0
    _
  %s8 = ssub.s32 1, %s6
  %s9 = scalar_select 0, %s8, %s6
  $region1: #{anet_forward.1} parent=0
    #allocation2 [shape = 'u8[4096]{0}', space=vmem, size = 0x1000, scoped, tag = 'input window, operand 0, single buffered']
    #allocation3 [shape = 's32[1]{0}', space=sflag, size = 0x4, scoped, tag = 'scoped memory for anet_forward.1']
    #allocation4 [shape = 'u8[8192]{0}', space=vmem, size = 0x2000, scoped, tag = 'input window, operand 1, single buffered']
    #allocation5 [shape = 's32[1]{0}', space=sflag, size = 0x4, scoped, tag = 'scoped memory for anet_forward.1']
    #allocation6 [shape = 'u8[65536]{0}', space=vmem, size = 0x10000, scoped, tag = 'input window, operand 3, single buffered']
    %10 = vsyncpa [#allocation3], 0
    %11 = vsyncpa [#allocation5], 0
    // Predicated region
    $region2: #{anet_forward.1} parent=1 // pred_check
      _
    $region3: #{anet_forward.1} parent=1 // pred_check_branch
      %13 = sbr.rel (0) target = $region5
    $region4: #{anet_forward.1} parent=1 // pred_region
      %15 = vsyncadd [#allocation3], 0
      %s17 = sshll.u32 %s0, 4
      %s18 = int_to_ptr.hbm [resolvable:$true] %s17
      %s19 = sshll.u32 [#allocation2], 4
      %s20 = int_to_ptr.vmem [resolvable:$true] %s19
      %22 = dma.hbm_to_vmem [thread:$0]  %s18, 128, %s20, [#allocation3]
    $region5: #{anet_forward.1} parent=1 // pred_fallthru
      _
    // Predicated region
    $region6: #{anet_forward.1} parent=1 // pred_check
      _
    $region7: #{anet_forward.1} parent=1 // pred_check_branch
      %24 = sbr.rel (0) target = $region9
    $region8: #{anet_forward.1} parent=1 // pred_region
      %26 = vsyncadd [#allocation5], 0
      %s27 = sshll.u32 %s1, 4
      %s28 = int_to_ptr.hbm [resolvable:$true] %s27
      %s29 = sshll.u32 [#allocation4], 4
      %s30 = int_to_ptr.vmem [resolvable:$true] %s29
      %35 = dma.hbm_to_vmem [thread:$0]  %s28, 256, %s30, [#allocation5], 128, 128, 8
    $region9: #{anet_forward.1} parent=1 // pred_fallthru
      _
    // Predicated region
    $region10: #{anet_forward.1} parent=1 // pred_check
      _
    $region11: #{anet_forward.1} parent=1 // pred_check_branch
      %37 = sbr.rel (0) target = $region13
    $region12: #{anet_forward.1} parent=1 // pred_region
      _
    $region13: #{anet_forward.1} parent=1 // pred_fallthru
      _
    // Predicated region
    $region14: #{anet_forward.1} parent=1 // pred_check
      _
    $region15: #{anet_forward.1} parent=1 // pred_check_branch
      %39 = sbr.rel (0) target = $region17
    $region16: #{anet_forward.1} parent=1 // pred_region
      %41 = vsyncadd [#allocation5], 0
      %s42 = sshll.u32 %s3, 4
      %s43 = int_to_ptr.hbm [resolvable:$true] %s42
      %s44 = sshll.u32 [#allocation6], 4
      %s45 = int_to_ptr.vmem [resolvable:$true] %s44
      %50 = dma.hbm_to_vmem [thread:$0]  %s43, 2048, %s45, [#allocation5], 128, 128, 8
    $region17: #{anet_forward.1} parent=1 // pred_fallthru
      _
    // Predicated region
    $region18: #{anet_forward.1} parent=1 // pred_check
      _
    $region19: #{anet_forward.1} parent=1 // pred_check_branch
      %52 = sbr.rel (0) target = $region21
    $region20: #{anet_forward.1} parent=1 // pred_region
      _
    $region21: #{anet_forward.1} parent=1 // pred_fallthru
      _
    // Predicated region
    $region22: #{anet_forward.1} parent=1 // pred_check
      _
    $region23: #{anet_forward.1} parent=1 // pred_check_branch
      %54 = sbr.rel (0) target = $region25
    $region24: #{anet_forward.1} parent=1 // pred_region
      %56 = dma.done [#allocation3], 128
    $region25: #{anet_forward.1} parent=1 // pred_fallthru
      _
    // Predicated region
    $region26: #{anet_forward.1} parent=1 // pred_check
      _
    $region27: #{anet_forward.1} parent=1 // pred_check_branch
      %58 = sbr.rel (0) target = $region29
    $region28: #{anet_forward.1} parent=1 // pred_region
      %60 = dma.done [#allocation5], 256
    $region29: #{anet_forward.1} parent=1 // pred_fallthru
      _
    // Predicated region
    $region30: #{anet_forward.1} parent=1 // pred_check
      _
    $region31: #{anet_forward.1} parent=1 // pred_check_branch
      %62 = sbr.rel (0) target = $region33
    $region32: #{anet_forward.1} parent=1 // pred_region
      %64 = dma.done [#allocation5], 2048
    $region33: #{anet_forward.1} parent=1 // pred_fallthru
      _
    %v65 = vld [vmem:[#allocation2] sm:$0xff]
    %v66 = vld [vmem:[#allocation4] sm:$0xff]
    %v67 = vld [vmem:[#allocation4 + $0x8] sm:$0xff]
    %v68 = vld [vmem:[%s2] sm:$0x1]
    %v70 = vperm.slane %v68, 0
    %vm72 = vcmask 130048
    %v74 = vsel %vm72, %v65, 0
    %76 = vmatpush.msra.mxu0 0.0
    %77 = vmatpush.msra.mxu0 0.0
    %78 = vmatpush.msra.mxu0 0.0
    %79 = vmatpush.msra.mxu0 0.0
    %80 = vmatpush.msra.mxu0 0.0
    %81 = vmatpush.msra.mxu0 0.0
    %82 = vmatpush.msra.mxu0 0.0
    %83 = vmatpush.msra.mxu0 0.0
    %84 = vmatpush.msra.mxu0 0.0
    %85 = vmatpush.msra.mxu0 0.0
    %86 = vmatpush.msra.mxu0 0.0
    %87 = vmatpush.msra.mxu0 0.0
    %88 = vmatpush.msra.mxu0 0.0
    %89 = vmatpush.msra.mxu0 0.0
    %90 = vmatpush.msra.mxu0 %v67
    %91 = vmatpush.msra.mxu0 %v66
    %92 = vmatmul.f32.gmra.mxu0 %v74
    %v93 = vpop.f32.mrf.mxu0
    %v94 = vadd.f32 %v70, %v93
    %95 = vdwg.mxu0
    %v96 = vmax.f32 %v94, 0.0
    %v97 = vld [vmem:[#allocation6] sm:$0xff]
    %v98 = vld [vmem:[#allocation6 + $0x8] sm:$0xff]
    %v99 = vld [vmem:[#allocation6 + $0x10] sm:$0xff]
    %v100 = vld [vmem:[#allocation6 + $0x18] sm:$0xff]
    %v101 = vld [vmem:[#allocation6 + $0x20] sm:$0xff]
    %v102 = vld [vmem:[#allocation6 + $0x28] sm:$0xff]
    %v103 = vld [vmem:[#allocation6 + $0x30] sm:$0xff]
    %v104 = vld [vmem:[#allocation6 + $0x38] sm:$0xff]
    %v105 = vld [vmem:[#allocation6 + $0x40] sm:$0xff]
    %v106 = vld [vmem:[#allocation6 + $0x48] sm:$0xff]
    %v107 = vld [vmem:[#allocation6 + $0x50] sm:$0xff]
    %v108 = vld [vmem:[#allocation6 + $0x58] sm:$0xff]
    %v109 = vld [vmem:[#allocation6 + $0x60] sm:$0xff]
    %v110 = vld [vmem:[#allocation6 + $0x68] sm:$0xff]
    %v111 = vld [vmem:[#allocation6 + $0x70] sm:$0xff]
    %v112 = vld [vmem:[#allocation6 + $0x78] sm:$0xff]
    %v113 = vld [vmem:[%s4] sm:$0x1]
    %v115 = vperm.slane %v113, 0
    %117 = vmatpush.msra.mxu0 %v112
    %118 = vmatpush.msra.mxu0 %v111
    %119 = vmatpush.msra.mxu0 %v110
    %120 = vmatpush.msra.mxu0 %v109
    %121 = vmatpush.msra.mxu0 %v108
    %122 = vmatpush.msra.mxu0 %v107
    %123 = vmatpush.msra.mxu0 %v106
    %124 = vmatpush.msra.mxu0 %v105
    %125 = vmatpush.msra.mxu0 %v104
    %126 = vmatpush.msra.mxu0 %v103
    %127 = vmatpush.msra.mxu0 %v102
    %128 = vmatpush.msra.mxu0 %v101
    %129 = vmatpush.msra.mxu0 %v100
    %130 = vmatpush.msra.mxu0 %v99
    %131 = vmatpush.msra.mxu0 %v98
    %132 = vmatpush.msra.mxu0 %v97
    %133 = vmatmul.f32.gmra.mxu0 %v96
    %v134 = vpop.f32.mrf.mxu0
    %v135 = vadd.f32 %v115, %v134
    %136 = vdwg.mxu0
    %v137 = vtanh.pop %v135
    %v138 = vmul.f32 %v137, 10.0
    %139 = vst [vmem:[%s5] sm:$0xff] %v138
    // Predicated region
    $region34: #{anet_forward.1} parent=1 // pred_check
      _
    $region35: #{anet_forward.1} parent=1 // pred_check_branch
      %141 = sbr.rel (0) target = $region37
    $region36: #{anet_forward.1} parent=1 // pred_region
      _
    $region37: #{anet_forward.1} parent=1 // pred_fallthru
      _
    // Predicated region
    $region38: #{anet_forward.1} parent=1 // pred_check
      _
    $region39: #{anet_forward.1} parent=1 // pred_check_branch
      %143 = sbr.rel (0) target = $region41
    $region40: #{anet_forward.1} parent=1 // pred_region
      _
    $region41: #{anet_forward.1} parent=1 // pred_fallthru
      _
    %144 = vsyncpa [#allocation3], 1
    %145 = vsyncpa [#allocation5], 1

</llo_original>
